<compile_context>
chip_gen: v6e
topology: v6e:2x2x1
jax: 0.10.0
libtpu: 0.0.40
codegen_flags: <defaults>
</compile_context>

<pallas_src>
import jax
import jax.numpy as jnp
from jax.experimental import pallas as pl
from jax.experimental.pallas import tpu as pltpu


def _round_up(x, m):
    return ((x + m - 1) // m) * m


# ----------------------------------------------------------------------------
# Kernel
# ----------------------------------------------------------------------------
def make_critic_kernel(o_fw1, n_fw1, o_fw2, o_w1f, o_w1ra, n_w1ra, o_w2, o_w3, H):
    """All offsets/sizes are static Python ints (rows in the bf16 weight slab).
    H == 128 == feature hidden == 2 * critic hidden == slab lane width."""
    bf16 = jnp.bfloat16
    f32 = jnp.float32

    def kernel(curve_ref, ra_ref, w_ref, b_ref, out_ref):
        # Biases (f32), one (1, 128) row each.
        fb1 = b_ref[0:1, :]
        fb2 = b_ref[1:2, :]
        b1 = b_ref[2:3, :]
        b2 = b_ref[3:4, :]
        b3 = b_ref[4:5, :]

        # --- Feature net (l3 is fused into the head's first layer) ---
        c = curve_ref[...].astype(bf16)
        h = jnp.dot(c, w_ref[o_fw1:o_fw1 + n_fw1, :],
                    preferred_element_type=f32) + fb1
        h = jnp.maximum(h, 0.0)
        h = jnp.dot(h.astype(bf16), w_ref[o_fw2:o_fw2 + H, :],
                    preferred_element_type=f32) + fb2
        h = jnp.maximum(h, 0.0)

        # --- Fused (feature.l3 o head.l1), both heads packed along lanes ---
        # cat([feat, robot, action]) @ W1
        #   == h @ (fw3 @ W1_f) + [robot|action] @ W1_ra + (fb3 @ W1_f + b1)
        ra = ra_ref[...].astype(bf16)
        z = (jnp.dot(h.astype(bf16), w_ref[o_w1f:o_w1f + H, :],
                     preferred_element_type=f32)
             + jnp.dot(ra, w_ref[o_w1ra:o_w1ra + n_w1ra, :],
                       preferred_element_type=f32)
             + b1)
        z = jnp.maximum(z, 0.0)

        # --- Head layer 2: block-diagonal (q1 | q2) as a single 128x128 matmul
        z = jnp.dot(z.astype(bf16), w_ref[o_w2:o_w2 + H, :],
                    preferred_element_type=f32) + b2
        z = jnp.maximum(z, 0.0)

        # --- Head layer 3: lanes 0/1 carry q1/q2; lane-dense (TB,128) store ---
        q = jnp.dot(z.astype(bf16), w_ref[o_w3:o_w3 + H, :],
                    preferred_element_type=f32) + b3
        out_ref[...] = q

    return kernel


# ----------------------------------------------------------------------------
# Parameter packing (wrapper-side, runs once)
# ----------------------------------------------------------------------------
def pack_critic_params(raw, curve_dim, robot_dim, action_dim,
                       feat_hidden=128, feat_out=16, head_hidden=64):
    (fw1, fb1, fw2, fb2, fw3, fb3,
     q1w1, q1b1, q1w2, q1b2, q1w3, q1b3,
     q2w1, q2b1, q2w2, q2b2, q2w3, q2b3) = raw

    assert feat_hidden == 128 and 2 * head_hidden == 128, \
        "lane packing assumes feature hidden == 128 and critic hidden == 64"
    H = feat_hidden
    F = feat_out
    Cp = _round_up(curve_dim, 16)          # bf16 sublane-tile aligned sections
    RA = robot_dim + action_dim
    RAp = _round_up(RA, 16)

    def pad_rows(w, rows):
        return jnp.zeros((rows, w.shape[1]), jnp.float32).at[:w.shape[0]].set(w)

    # Split head first-layer weights along the concat order [feat, robot, action].
    q1w1f, q1w1ra = q1w1[:F, :], q1w1[F:, :]
    q2w1f, q2w1ra = q2w1[:F, :], q2w1[F:, :]

    # Fuse feature.l3 into each head's first layer (fold fb3 into the bias).
    w1f_cat = jnp.concatenate([fw3 @ q1w1f, fw3 @ q2w1f], axis=1)               # (H,128)
    b1_cat = jnp.concatenate([fb3 @ q1w1f + q1b1, fb3 @ q2w1f + q2b1], axis=1)  # (1,128)
    w1ra_cat = pad_rows(jnp.concatenate([q1w1ra, q2w1ra], axis=1), RAp)         # (RAp,128)

    # Block-diagonal second layer for both heads.
    w2_bd = jnp.zeros((128, 128), jnp.float32)
    w2_bd = w2_bd.at[:64, :64].set(q1w2).at[64:, 64:].set(q2w2)
    b2_cat = jnp.concatenate([q1b2, q2b2], axis=1)                              # (1,128)

    # Final layer padded to 128 output lanes: lane 0 = q1, lane 1 = q2.
    w3_p = jnp.zeros((128, 128), jnp.float32)
    w3_p = w3_p.at[:64, 0].set(q1w3[:, 0]).at[64:, 1].set(q2w3[:, 0])
    b3_p = jnp.zeros((1, 128), jnp.float32)
    b3_p = b3_p.at[0, 0].set(q1b3[0, 0]).at[0, 1].set(q2b3[0, 0])

    fw1_p = pad_rows(fw1, Cp)

    sections = [fw1_p, fw2, w1f_cat, w1ra_cat, w2_bd, w3_p]
    offs, row = [], 0
    for s in sections:
        offs.append(row)
        row += s.shape[0]
    w_slab = jnp.concatenate(sections, axis=0).astype(jnp.bfloat16)             # (rows,128)

    b_slab = jnp.zeros((8, 128), jnp.float32)
    b_slab = (b_slab.at[0:1].set(fb1).at[1:2].set(fb2).at[2:3].set(b1_cat)
                    .at[3:4].set(b2_cat).at[4:5].set(b3_p))

    meta = dict(Cp=Cp, RAp=RAp, H=H,
                o_fw1=offs[0], o_fw2=offs[1], o_w1f=offs[2],
                o_w1ra=offs[3], o_w2=offs[4], o_w3=offs[5])
    return w_slab, b_slab, meta


# ----------------------------------------------------------------------------
# Forward wrapper
# ----------------------------------------------------------------------------
def critic_forward(curve, robot, action, w_slab, b_slab, meta):
    B = curve.shape[0]
    Cp, RAp, H = meta["Cp"], meta["RAp"], meta["H"]
    RA = robot.shape[1] + action.shape[1]

    # Batch tile: parallel grid axis (uses both v7x TensorCores for big batches),
    # capped so activation tiles stay far inside the 32 MiB scoped VMEM.
    TB = min(_round_up(B, 8), 256)
    Bp = _round_up(B, TB)

    curve_p = jnp.zeros((Bp, Cp), jnp.float32).at[:B, :curve.shape[1]].set(curve)
    ra_p = jnp.zeros((Bp, RAp), jnp.float32).at[:B, :RA].set(
        jnp.concatenate([robot, action], axis=1))

    kernel = make_critic_kernel(meta["o_fw1"], Cp, meta["o_fw2"], meta["o_w1f"],
                                meta["o_w1ra"], RAp, meta["o_w2"], meta["o_w3"], H)

    out = pl.pallas_call(
        kernel,
        out_shape=jax.ShapeDtypeStruct((Bp, 128), jnp.float32),
        grid=(Bp // TB,),
        in_specs=[
            pl.BlockSpec((TB, Cp), lambda i: (i, 0)),
            pl.BlockSpec((TB, RAp), lambda i: (i, 0)),
            pl.BlockSpec(w_slab.shape, lambda i: (0, 0)),   # weights stay resident
            pl.BlockSpec(b_slab.shape, lambda i: (0, 0)),
        ],
        out_specs=pl.BlockSpec((TB, 128), lambda i: (i, 0)),
        compiler_params=pltpu.CompilerParams(
            dimension_semantics=("parallel",)),
    )(curve_p, ra_p, w_slab, b_slab)

    return out[:B, 0:1], out[:B, 1:2]


# ----------------------------------------------------------------------------
# References
# ----------------------------------------------------------------------------
def reference_forward(curve, robot, action, raw):
    """Pure-f32 JAX reference matching the PyTorch Critic semantics exactly."""
    (fw1, fb1, fw2, fb2, fw3, fb3,
     q1w1, q1b1, q1w2, q1b2, q1w3, q1b3,
     q2w1, q2b1, q2w2, q2b2, q2w3, q2b3) = raw
    h = jax.nn.relu(curve @ fw1 + fb1)
    h = jax.nn.relu(h @ fw2 + fb2)
    feat = h @ fw3 + fb3
    x = jnp.concatenate([feat, robot, action], axis=1)
    q1 = jax.nn.relu(x @ q1w1 + q1b1)
    q1 = jax.nn.relu(q1 @ q1w2 + q1b2)
    q1 = q1 @ q1w3 + q1b3
    q2 = jax.nn.relu(x @ q2w1 + q2b1)
    q2 = jax.nn.relu(q2 @ q2w2 + q2b2)
    q2 = q2 @ q2w3 + q2b3
    return q1, q2


def packed_reference(curve, robot, action, w_slab, b_slab, meta):
    """Same fused/packed bf16 math as the kernel, in plain jnp (tight check)."""
    bf16, f32 = jnp.bfloat16, jnp.float32
    B = curve.shape[0]
    Cp, RAp, H = meta["Cp"], meta["RAp"], meta["H"]
    c = jnp.zeros((B, Cp), f32).at[:, :curve.shape[1]].set(curve).astype(bf16)
    ra = jnp.zeros((B, RAp), f32).at[:, :robot.shape[1] + action.shape[1]].set(
        jnp.concatenate([robot, action], axis=1)).astype(bf16)

    def sec(o, n):
        return w_slab[o:o + n, :]

    h = jnp.dot(c, sec(meta["o_fw1"], Cp), preferred_element_type=f32) + b_slab[0:1]
    h = jnp.maximum(h, 0.0)
    h = jnp.dot(h.astype(bf16), sec(meta["o_fw2"], H), preferred_element_type=f32) + b_slab[1:2]
    h = jnp.maximum(h, 0.0)
    z = (jnp.dot(h.astype(bf16), sec(meta["o_w1f"], H), preferred_element_type=f32)
         + jnp.dot(ra, sec(meta["o_w1ra"], RAp), preferred_element_type=f32)
         + b_slab[2:3])
    z = jnp.maximum(z, 0.0)
    z = jnp.dot(z.astype(bf16), sec(meta["o_w2"], H), preferred_element_type=f32) + b_slab[3:4]
    z = jnp.maximum(z, 0.0)
    q = jnp.dot(z.astype(bf16), sec(meta["o_w3"], H), preferred_element_type=f32) + b_slab[4:5]
    return q[:, 0:1], q[:, 1:2]


# ----------------------------------------------------------------------------
# Demo / self-test
# ----------------------------------------------------------------------------
if __name__ == "__main__":
    batch = 8
    curve_dim = 32      # Feature.input_dim
    feat_hidden = 128   # Feature hidden_dim (module default)
    feat_out = 16       # Feature.output_dim
    robot_dim = 8       # Critic "input_dim" arg
    action_dim = 4
    head_hidden = 64    # Critic hidden_dim (module default)

    key = jax.random.PRNGKey(0)
    keys = jax.random.split(key, 12)

    def init_linear(k, i, o):
        """PyTorch-style Linear init, weight stored (in, out), bias (1, out)."""
        kw, kb = jax.random.split(k)
        bound = 1.0 / jnp.sqrt(jnp.float32(i))
        w = jax.random.uniform(kw, (i, o), jnp.float32, -bound, bound)
        b = jax.random.uniform(kb, (1, o), jnp.float32, -bound, bound)
        return w, b

    fw1, fb1 = init_linear(keys[0], curve_dim, feat_hidden)
    fw2, fb2 = init_linear(keys[1], feat_hidden, feat_hidden)
    fw3, fb3 = init_linear(keys[2], feat_hidden, feat_out)

    in_dim = feat_out + robot_dim + action_dim
    q1w1, q1b1 = init_linear(keys[3], in_dim, head_hidden)
    q1w2, q1b2 = init_linear(keys[4], head_hidden, head_hidden)
    q1w3, q1b3 = init_linear(keys[5], head_hidden, 1)
    q2w1, q2b1 = init_linear(keys[6], in_dim, head_hidden)
    q2w2, q2b2 = init_linear(keys[7], head_hidden, head_hidden)
    q2w3, q2b3 = init_linear(keys[8], head_hidden, 1)

    raw = (fw1, fb1, fw2, fb2, fw3, fb3,
           q1w1, q1b1, q1w2, q1b2, q1w3, q1b3,
           q2w1, q2b1, q2w2, q2b2, q2w3, q2b3)

    curve = jax.random.normal(keys[9], (batch, curve_dim), jnp.float32)
    robot = jax.random.normal(keys[10], (batch, robot_dim), jnp.float32)
    action = jax.random.normal(keys[11], (batch, action_dim), jnp.float32)

    w_slab, b_slab, meta = pack_critic_params(
        raw, curve_dim, robot_dim, action_dim, feat_hidden, feat_out, head_hidden)

    q1, q2 = critic_forward(curve, robot, action, w_slab, b_slab, meta)
    q1 = jax.block_until_ready(q1)
    q2 = jax.block_until_ready(q2)

    # Tight check vs. matched-precision (bf16, fused) pure-JAX reference.
    p1, p2 = packed_reference(curve, robot, action, w_slab, b_slab, meta)
    # Loose check vs. exact f32 PyTorch-semantics reference (bf16 weights).
    r1, r2 = reference_forward(curve, robot, action, raw)

    assert q1.shape == (batch, 1) and q2.shape == (batch, 1)
    assert jnp.allclose(q1, p1, atol=2e-3, rtol=2e-3), "kernel vs packed ref mismatch"
    assert jnp.allclose(q2, p2, atol=2e-3, rtol=2e-3), "kernel vs packed ref mismatch"
    assert jnp.allclose(q1, r1, atol=5e-2, rtol=5e-2), "kernel vs f32 module ref mismatch"
    assert jnp.allclose(q2, r2, atol=5e-2, rtol=5e-2), "kernel vs f32 module ref mismatch"

    print("KERNEL_OK")
</pallas_src>

<mosaic_0001>
module attributes {stable_mosaic.version = 11 : i64} {
  func.func @kernel(%arg0: i32, %arg1: memref<8x32xf32, #tpu.memory_space<vmem>>, %arg2: memref<8x16xf32, #tpu.memory_space<vmem>>, %arg3: memref<560x128xbf16, #tpu.memory_space<vmem>>, %arg4: memref<8x128xf32, #tpu.memory_space<vmem>>, %arg5: memref<8x128xf32, #tpu.memory_space<vmem>>) attributes {dimension_semantics = [#tpu.dimension_semantics<parallel>], iteration_bounds = array<i64: 1>, scalar_prefetch = 0 : i64, scratch_operands = 0 : i64, tpu.core_type = #tpu.core_type<tc>, window_params = [{transform_indices = @transform_0, window_bounds = array<i64: 8, 32>}, {transform_indices = @transform_1, window_bounds = array<i64: 8, 16>}, {pipeline_mode = #tpu.pipeline_mode<synchronous>, transform_indices = @transform_2, window_bounds = array<i64: 560, 128>}, {pipeline_mode = #tpu.pipeline_mode<synchronous>, transform_indices = @transform_3, window_bounds = array<i64: 8, 128>}, {transform_indices = @transform_4, window_bounds = array<i64: 8, 128>}]} {
    %c0 = arith.constant 0 : index
    %c0_0 = arith.constant 0 : index
    %0 = vector.load %arg4[%c0, %c0_0] : memref<8x128xf32, #tpu.memory_space<vmem>>, vector<1x128xf32>
    %c1 = arith.constant 1 : index
    %c0_1 = arith.constant 0 : index
    %1 = vector.load %arg4[%c1, %c0_1] : memref<8x128xf32, #tpu.memory_space<vmem>>, vector<1x128xf32>
    %c2 = arith.constant 2 : index
    %c0_2 = arith.constant 0 : index
    %2 = vector.load %arg4[%c2, %c0_2] : memref<8x128xf32, #tpu.memory_space<vmem>>, vector<1x128xf32>
    %c3 = arith.constant 3 : index
    %c0_3 = arith.constant 0 : index
    %3 = vector.load %arg4[%c3, %c0_3] : memref<8x128xf32, #tpu.memory_space<vmem>>, vector<1x128xf32>
    %c4 = arith.constant 4 : index
    %c0_4 = arith.constant 0 : index
    %4 = vector.load %arg4[%c4, %c0_4] : memref<8x128xf32, #tpu.memory_space<vmem>>, vector<1x128xf32>
    %c0_5 = arith.constant 0 : index
    %c0_6 = arith.constant 0 : index
    %5 = vector.load %arg1[%c0_5, %c0_6] : memref<8x32xf32, #tpu.memory_space<vmem>>, vector<8x32xf32>
    %6 = arith.truncf %5 : vector<8x32xf32> to vector<8x32xbf16>
    %c0_7 = arith.constant 0 : index
    %c0_8 = arith.constant 0 : index
    %7 = vector.load %arg3[%c0_7, %c0_8] : memref<560x128xbf16, #tpu.memory_space<vmem>>, vector<32x128xbf16>
    %cst = arith.constant dense<0.000000e+00> : vector<8x128xf32>
    %8 = tpu.matmul %6, %7, %cst {dimension_numbers = #tpu.dot_dimension_numbers<[1], [0], [0], [1], [0, 0, 1, 1], [], []>} : vector<8x32xbf16>, vector<32x128xbf16>, vector<8x128xf32> -> vector<8x128xf32>
    %9 = vector.broadcast %0 : vector<1x128xf32> to vector<8x128xf32>
    %10 = arith.addf %8, %9 : vector<8x128xf32>
    %cst_9 = arith.constant 0.000000e+00 : f32
    %11 = vector.broadcast %cst_9 : f32 to vector<8x128xf32>
    %12 = arith.maximumf %10, %11 : vector<8x128xf32>
    %13 = arith.truncf %12 : vector<8x128xf32> to vector<8x128xbf16>
    %c32 = arith.constant 32 : index
    %c0_10 = arith.constant 0 : index
    %14 = vector.load %arg3[%c32, %c0_10] : memref<560x128xbf16, #tpu.memory_space<vmem>>, vector<128x128xbf16>
    %cst_11 = arith.constant dense<0.000000e+00> : vector<8x128xf32>
    %15 = tpu.matmul %13, %14, %cst_11 {dimension_numbers = #tpu.dot_dimension_numbers<[1], [0], [0], [1], [0, 0, 1, 1], [], []>} : vector<8x128xbf16>, vector<128x128xbf16>, vector<8x128xf32> -> vector<8x128xf32>
    %16 = vector.broadcast %1 : vector<1x128xf32> to vector<8x128xf32>
    %17 = arith.addf %15, %16 : vector<8x128xf32>
    %cst_12 = arith.constant 0.000000e+00 : f32
    %18 = vector.broadcast %cst_12 : f32 to vector<8x128xf32>
    %19 = arith.maximumf %17, %18 : vector<8x128xf32>
    %c0_13 = arith.constant 0 : index
    %c0_14 = arith.constant 0 : index
    %20 = vector.load %arg2[%c0_13, %c0_14] : memref<8x16xf32, #tpu.memory_space<vmem>>, vector<8x16xf32>
    %21 = arith.truncf %20 : vector<8x16xf32> to vector<8x16xbf16>
    %22 = arith.truncf %19 : vector<8x128xf32> to vector<8x128xbf16>
    %c160 = arith.constant 160 : index
    %c0_15 = arith.constant 0 : index
    %23 = vector.load %arg3[%c160, %c0_15] : memref<560x128xbf16, #tpu.memory_space<vmem>>, vector<128x128xbf16>
    %cst_16 = arith.constant dense<0.000000e+00> : vector<8x128xf32>
    %24 = tpu.matmul %22, %23, %cst_16 {dimension_numbers = #tpu.dot_dimension_numbers<[1], [0], [0], [1], [0, 0, 1, 1], [], []>} : vector<8x128xbf16>, vector<128x128xbf16>, vector<8x128xf32> -> vector<8x128xf32>
    %c288 = arith.constant 288 : index
    %c0_17 = arith.constant 0 : index
    %25 = vector.load %arg3[%c288, %c0_17] : memref<560x128xbf16, #tpu.memory_space<vmem>>, vector<16x128xbf16>
    %cst_18 = arith.constant dense<0.000000e+00> : vector<8x128xf32>
    %26 = tpu.matmul %21, %25, %cst_18 {dimension_numbers = #tpu.dot_dimension_numbers<[1], [0], [0], [1], [0, 0, 1, 1], [], []>} : vector<8x16xbf16>, vector<16x128xbf16>, vector<8x128xf32> -> vector<8x128xf32>
    %27 = arith.addf %24, %26 : vector<8x128xf32>
    %28 = vector.broadcast %2 : vector<1x128xf32> to vector<8x128xf32>
    %29 = arith.addf %27, %28 : vector<8x128xf32>
    %cst_19 = arith.constant 0.000000e+00 : f32
    %30 = vector.broadcast %cst_19 : f32 to vector<8x128xf32>
    %31 = arith.maximumf %29, %30 : vector<8x128xf32>
    %32 = arith.truncf %31 : vector<8x128xf32> to vector<8x128xbf16>
    %c304 = arith.constant 304 : index
    %c0_20 = arith.constant 0 : index
    %33 = vector.load %arg3[%c304, %c0_20] : memref<560x128xbf16, #tpu.memory_space<vmem>>, vector<128x128xbf16>
    %cst_21 = arith.constant dense<0.000000e+00> : vector<8x128xf32>
    %34 = tpu.matmul %32, %33, %cst_21 {dimension_numbers = #tpu.dot_dimension_numbers<[1], [0], [0], [1], [0, 0, 1, 1], [], []>} : vector<8x128xbf16>, vector<128x128xbf16>, vector<8x128xf32> -> vector<8x128xf32>
    %35 = vector.broadcast %3 : vector<1x128xf32> to vector<8x128xf32>
    %36 = arith.addf %34, %35 : vector<8x128xf32>
    %cst_22 = arith.constant 0.000000e+00 : f32
    %37 = vector.broadcast %cst_22 : f32 to vector<8x128xf32>
    %38 = arith.maximumf %36, %37 : vector<8x128xf32>
    %39 = arith.truncf %38 : vector<8x128xf32> to vector<8x128xbf16>
    %c432 = arith.constant 432 : index
    %c0_23 = arith.constant 0 : index
    %40 = vector.load %arg3[%c432, %c0_23] : memref<560x128xbf16, #tpu.memory_space<vmem>>, vector<128x128xbf16>
    %cst_24 = arith.constant dense<0.000000e+00> : vector<8x128xf32>
    %41 = tpu.matmul %39, %40, %cst_24 {dimension_numbers = #tpu.dot_dimension_numbers<[1], [0], [0], [1], [0, 0, 1, 1], [], []>} : vector<8x128xbf16>, vector<128x128xbf16>, vector<8x128xf32> -> vector<8x128xf32>
    %42 = vector.broadcast %4 : vector<1x128xf32> to vector<8x128xf32>
    %43 = arith.addf %41, %42 : vector<8x128xf32>
    %c0_25 = arith.constant 0 : index
    %c0_26 = arith.constant 0 : index
    %44 = vector.load %arg5[%c0_25, %c0_26] : memref<8x128xf32, #tpu.memory_space<vmem>>, vector<8x128xf32>
    tpu.vector_store %arg5[%c0_25, %c0_26], %43 {strides = array<i32>} : memref<8x128xf32, #tpu.memory_space<vmem>>, vector<8x128xf32>,
    return
  }
  func.func @transform_0(%arg0: i32) -> (i32, i32) {
    %c0_i32 = arith.constant 0 : i32
    %c0_i32_0 = arith.constant 0 : i32
    return %arg0, %c0_i32 : i32, i32
  }
  func.func @transform_1(%arg0: i32) -> (i32, i32) {
    %c0_i32 = arith.constant 0 : i32
    %c0_i32_0 = arith.constant 0 : i32
    return %arg0, %c0_i32 : i32, i32
  }
  func.func @transform_2(%arg0: i32) -> (i32, i32) {
    %c0_i32 = arith.constant 0 : i32
    %c0_i32_0 = arith.constant 0 : i32
    %c0_i32_1 = arith.constant 0 : i32
    return %c0_i32, %c0_i32_0 : i32, i32
  }
  func.func @transform_3(%arg0: i32) -> (i32, i32) {
    %c0_i32 = arith.constant 0 : i32
    %c0_i32_0 = arith.constant 0 : i32
    %c0_i32_1 = arith.constant 0 : i32
    return %c0_i32, %c0_i32_0 : i32, i32
  }
  func.func @transform_4(%arg0: i32) -> (i32, i32) {
    %c0_i32 = arith.constant 0 : i32
    %c0_i32_0 = arith.constant 0 : i32
    return %arg0, %c0_i32 : i32, i32
  }
}

</mosaic_0001>

<llo_original>
// kernel: tpu_custom_call.1
$region0: #{tpu_custom_call.1}
  #allocation0 [shape = 'u32[]', space=smem, size = 0x4, offset = 0x4, fixed_abs, tag = 'smem constant byte address 0x4 - core index']
  #allocation1 [shape = 'u32[144,128]{1,0:T(1,128)}', space=vmem, size = 0x12000, scoped, tag = 'internal scratch']
  %s0 = inlined_call_operand.hbm [shape: f32[8,32], index: 0, kind: input, shape index: {}]
  %s1 = inlined_call_operand.hbm [shape: f32[8,16], index: 1, kind: input, shape index: {}]
  %s2 = inlined_call_operand.hbm [shape: bf16[560,128], index: 2, kind: input, shape index: {}]
  %s3 = inlined_call_operand.hbm [shape: f32[8,128], index: 3, kind: input, shape index: {}]
  %s4 = inlined_call_operand.hbm [shape: f32[8,128], index: 4, kind: output, shape index: {}]
  %s5 = sld [smem:[#allocation0]]
  $region42: #{tpu_custom_call.1} parent=0
    _
  %s7 = ssub.s32 1, %s5
  %s8 = scalar_select 0, %s7, %s5
  $region1: #{tpu_custom_call.1} parent=0
    #allocation2 [shape = 'u8[4096]{0}', space=vmem, size = 0x1000, scoped, tag = 'input window, operand 0, single buffered']
    #allocation3 [shape = 's32[1]{0}', space=sflag, size = 0x4, scoped, tag = 'scoped memory for tpu_custom_call.1']
    #allocation4 [shape = 's32[1]{0}', space=sflag, size = 0x4, scoped, tag = 'scoped memory for tpu_custom_call.1']
    #allocation5 [shape = 'u8[4096]{0}', space=vmem, size = 0x1000, scoped, tag = 'input window, operand 1, single buffered']
    #allocation6 [shape = 's32[1]{0}', space=sflag, size = 0x4, scoped, tag = 'scoped memory for tpu_custom_call.1']
    #allocation7 [shape = 'u8[143360]{0}', space=vmem, size = 0x23000, scoped, tag = 'input window, operand 2, single buffered']
    #allocation8 [shape = 'u8[4096]{0}', space=vmem, size = 0x1000, scoped, tag = 'input window, operand 3, single buffered']
    #allocation9 [shape = 's32[1]{0}', space=sflag, size = 0x4, scoped, tag = 'scoped memory for tpu_custom_call.1']
    #allocation10 [shape = 'u8[4096]{0}', space=vmem, size = 0x1000, scoped, tag = 'output window, operand 0, single buffered']
    %9 = vsyncpa [#allocation3], 0
    %10 = vsyncpa [#allocation6], 0
    %11 = vsyncpa [#allocation9], 0
    %12 = vsyncpa [#allocation4], 0
    // Predicated region
    $region2: #{tpu_custom_call.1} parent=1 // pred_check
      _
    $region3: #{tpu_custom_call.1} parent=1 // pred_check_branch
      %14 = sbr.rel (0) target = $region5
    $region4: #{tpu_custom_call.1} parent=1 // pred_region
      %s16 = ssub.s32 128, 128
      %17 = vsyncadd [#allocation3], %s16
      %s19 = sshll.u32 [#allocation2], 4
      %s20 = int_to_ptr.vmem [resolvable:$true] %s19
      %22 = dma.hbm_to_vmem [thread:$0]  %s0, 128, %s20, [#allocation3]
    $region5: #{tpu_custom_call.1} parent=1 // pred_fallthru
      _
    // Predicated region
    $region6: #{tpu_custom_call.1} parent=1 // pred_check
      _
    $region7: #{tpu_custom_call.1} parent=1 // pred_check_branch
      %24 = sbr.rel (0) target = $region9
    $region8: #{tpu_custom_call.1} parent=1 // pred_region
      %s26 = ssub.s32 128, 128
      %27 = vsyncadd [#allocation6], %s26
      %s29 = sshll.u32 [#allocation5], 4
      %s30 = int_to_ptr.vmem [resolvable:$true] %s29
      %32 = dma.hbm_to_vmem [thread:$0]  %s1, 128, %s30, [#allocation6]
    $region9: #{tpu_custom_call.1} parent=1 // pred_fallthru
      _
    // Predicated region
    $region10: #{tpu_custom_call.1} parent=1 // pred_check
      _
    $region11: #{tpu_custom_call.1} parent=1 // pred_check_branch
      %34 = sbr.rel (0) target = $region13
    $region12: #{tpu_custom_call.1} parent=1 // pred_region
      %s36 = ssub.s32 4480, 4480
      %37 = vsyncadd [#allocation6], %s36
      %s38 = sshll.u32 [#allocation7], 4
      %s39 = int_to_ptr.vmem [resolvable:$true] %s38
      %44 = dma.hbm_to_vmem [thread:$0]  %s2, 4480, %s39, [#allocation6], 64, 64, 4
    $region13: #{tpu_custom_call.1} parent=1 // pred_fallthru
      _
    // Predicated region
    $region14: #{tpu_custom_call.1} parent=1 // pred_check
      _
    $region15: #{tpu_custom_call.1} parent=1 // pred_check_branch
      %46 = sbr.rel (0) target = $region17
    $region16: #{tpu_custom_call.1} parent=1 // pred_region
      %s48 = ssub.s32 128, 128
      %49 = vsyncadd [#allocation9], %s48
      %s51 = sshll.u32 [#allocation8], 4
      %s52 = int_to_ptr.vmem [resolvable:$true] %s51
      %54 = dma.hbm_to_vmem [thread:$0]  %s3, 128, %s52, [#allocation9]
    $region17: #{tpu_custom_call.1} parent=1 // pred_fallthru
      _
    // Predicated region
    $region18: #{tpu_custom_call.1} parent=1 // pred_check
      _
    $region19: #{tpu_custom_call.1} parent=1 // pred_check_branch
      %56 = sbr.rel (0) target = $region21
    $region20: #{tpu_custom_call.1} parent=1 // pred_region
      %57 = dma.done [#allocation3], 128
    $region21: #{tpu_custom_call.1} parent=1 // pred_fallthru
      _
    // Predicated region
    $region22: #{tpu_custom_call.1} parent=1 // pred_check
      _
    $region23: #{tpu_custom_call.1} parent=1 // pred_check_branch
      %59 = sbr.rel (0) target = $region25
    $region24: #{tpu_custom_call.1} parent=1 // pred_region
      %60 = dma.done [#allocation6], 128
    $region25: #{tpu_custom_call.1} parent=1 // pred_fallthru
      _
    // Predicated region
    $region26: #{tpu_custom_call.1} parent=1 // pred_check
      _
    $region27: #{tpu_custom_call.1} parent=1 // pred_check_branch
      %62 = sbr.rel (0) target = $region29
    $region28: #{tpu_custom_call.1} parent=1 // pred_region
      %63 = dma.done [#allocation6], 4480
    $region29: #{tpu_custom_call.1} parent=1 // pred_fallthru
      _
    // Predicated region
    $region30: #{tpu_custom_call.1} parent=1 // pred_check
      _
    $region31: #{tpu_custom_call.1} parent=1 // pred_check_branch
      %65 = sbr.rel (0) target = $region33
    $region32: #{tpu_custom_call.1} parent=1 // pred_region
      %66 = dma.done [#allocation9], 128
    $region33: #{tpu_custom_call.1} parent=1 // pred_fallthru
      _
    %v68 = vld [vmem:[#allocation8] sm:$0x1]
    %v69 = vld [vmem:[#allocation8 + $0x1] sm:$0x1]
    %v70 = vld [vmem:[#allocation8 + $0x2] sm:$0x1]
    %v71 = vld [vmem:[#allocation8 + $0x3] sm:$0x1]
    %v72 = vld [vmem:[#allocation8 + $0x4] sm:$0x1]
    %v73 = vld [vmem:[#allocation2] sm:$0xff]
    %v74 = vpack.c.bf16 %v73, %v73
    %v75 = vld [vmem:[#allocation7] sm:$0xf]
    %v76 = vld [vmem:[#allocation7 + $0x4] sm:$0xf]
    %v77 = vld [vmem:[#allocation7 + $0x8] sm:$0xf]
    %v78 = vld [vmem:[#allocation7 + $0xc] sm:$0xf]
    %v79 = vlaneseq
    %v80 = vshrl.u32 %v79, 7
    %v81 = vsub.s32 0, %v80
    %v82 = vrot.slane %v68, %v81
    %v87 = vunpack.c.l.b16 %v75
    %v88 = vunpack.c.l.b16 %v76
    %v89 = vunpack.c.l.b16 %v77
    %v90 = vunpack.c.l.b16 %v78
    %v91 = vpack.c.b16 %v88, %v87
    %v92 = vpack.c.b16 %v90, %v89
    %vm95 = vcmask 261120
    %v97 = vsel %vm95, %v74, 0
    %99 = vmatprep.subr.bf16.mxu0 0
    %100 = vmatpush1.bf16.msra.mxu0 0
    %101 = vmatprep.subr.bf16.mxu0 0
    %102 = vmatpush1.bf16.msra.mxu0 0
    %103 = vmatprep.subr.bf16.mxu0 0
    %104 = vmatpush1.bf16.msra.mxu0 0
    %105 = vmatprep.subr.bf16.mxu0 0
    %106 = vmatpush1.bf16.msra.mxu0 0
    %107 = vmatprep.subr.bf16.mxu0 0
    %108 = vmatpush1.bf16.msra.mxu0 0
    %109 = vmatprep.subr.bf16.mxu0 0
    %110 = vmatpush1.bf16.msra.mxu0 0
    %111 = vmatprep.subr.bf16.mxu0 0
    %112 = vmatpush1.bf16.msra.mxu0 %v92
    %113 = vmatprep.subr.bf16.mxu0 0
    %114 = vmatpush1.bf16.msra.mxu0 %v91
    %115 = vmatprep.subr.bf16.mxu0 0
    %116 = vmatpush2.bf16.msra.mxu0 0
    %117 = vmatprep.subr.bf16.mxu0 0
    %118 = vmatpush2.bf16.msra.mxu0 0
    %119 = vmatprep.subr.bf16.mxu0 0
    %120 = vmatpush2.bf16.msra.mxu0 0
    %121 = vmatprep.subr.bf16.mxu0 0
    %122 = vmatpush2.bf16.msra.mxu0 0
    %123 = vmatprep.subr.bf16.mxu0 0
    %124 = vmatpush2.bf16.msra.mxu0 0
    %125 = vmatprep.subr.bf16.mxu0 0
    %126 = vmatpush2.bf16.msra.mxu0 0
    %127 = vmatprep.subr.bf16.mxu0 0
    %128 = vmatpush2.bf16.msra.mxu0 0
    %129 = vmatprep.subr.bf16.mxu0 0
    %130 = vmatpush2.bf16.msra.mxu0 0
    %131 = vmatprep.mubr.bf16.mxu0 0
    %132 = vmatmul.mubr.bf16.gmra.mxu0 %v97
    %v133 = vpop.f32.mrf.mxu0
    %v134 = vadd.f32 %v82, %v133
    %v135 = vpop.f32.mrf.mxu0
    %v136 = vpop.f32.mrf.mxu0
    %v137 = vpop.f32.mrf.mxu0
    %138 = vdwg.mxu0
    %v139 = vmax.f32 %v134, 0.0
    %v140 = vpack.c.bf16 %v139, %v139
    %v141 = vld [vmem:[#allocation7 + $0x10] sm:$0xf]
    %v142 = vld [vmem:[#allocation7 + $0x14] sm:$0xf]
    %v143 = vld [vmem:[#allocation7 + $0x18] sm:$0xf]
    %v144 = vld [vmem:[#allocation7 + $0x1c] sm:$0xf]
    %v145 = vld [vmem:[#allocation7 + $0x20] sm:$0xf]
    %v146 = vld [vmem:[#allocation7 + $0x24] sm:$0xf]
    %v147 = vld [vmem:[#allocation7 + $0x28] sm:$0xf]
    %v148 = vld [vmem:[#allocation7 + $0x2c] sm:$0xf]
    %v149 = vld [vmem:[#allocation7 + $0x30] sm:$0xf]
    %v150 = vld [vmem:[#allocation7 + $0x34] sm:$0xf]
    %v151 = vld [vmem:[#allocation7 + $0x38] sm:$0xf]
    %v152 = vld [vmem:[#allocation7 + $0x3c] sm:$0xf]
    %v153 = vld [vmem:[#allocation7 + $0x40] sm:$0xf]
    %v154 = vld [vmem:[#allocation7 + $0x44] sm:$0xf]
    %v155 = vld [vmem:[#allocation7 + $0x48] sm:$0xf]
    %v156 = vld [vmem:[#allocation7 + $0x4c] sm:$0xf]
    %v157 = vlaneseq
    %v158 = vshrl.u32 %v157, 7
    %v159 = vsub.s32 0, %v158
    %v160 = vrot.slane %v69, %v159
    %v177 = vunpack.c.l.b16 %v141
    %v178 = vunpack.c.l.b16 %v142
    %v179 = vunpack.c.l.b16 %v143
    %v180 = vunpack.c.l.b16 %v144
    %v181 = vunpack.c.l.b16 %v145
    %v182 = vunpack.c.l.b16 %v146
    %v183 = vunpack.c.l.b16 %v147
    %v184 = vunpack.c.l.b16 %v148
    %v185 = vunpack.c.l.b16 %v149
    %v186 = vunpack.c.l.b16 %v150
    %v187 = vunpack.c.l.b16 %v151
    %v188 = vunpack.c.l.b16 %v152
    %v189 = vunpack.c.l.b16 %v153
    %v190 = vunpack.c.l.b16 %v154
    %v191 = vunpack.c.l.b16 %v155
    %v192 = vunpack.c.l.b16 %v156
    %v193 = vpack.c.b16 %v178, %v177
    %v194 = vpack.c.b16 %v180, %v179
    %v195 = vpack.c.b16 %v182, %v181
    %v196 = vpack.c.b16 %v184, %v183
    %v197 = vpack.c.b16 %v186, %v185
    %v198 = vpack.c.b16 %v188, %v187
    %v199 = vpack.c.b16 %v190, %v189
    %v200 = vpack.c.b16 %v192, %v191
    %209 = vmatprep.subr.bf16.mxu0 0
    %210 = vmatpush1.bf16.msra.mxu0 %v200
    %211 = vmatprep.subr.bf16.mxu0 0
    %212 = vmatpush1.bf16.msra.mxu0 %v199
    %213 = vmatprep.subr.bf16.mxu0 0
    %214 = vmatpush1.bf16.msra.mxu0 %v198
    %215 = vmatprep.subr.bf16.mxu0 0
    %216 = vmatpush1.bf16.msra.mxu0 %v197
    %217 = vmatprep.subr.bf16.mxu0 0
    %218 = vmatpush1.bf16.msra.mxu0 %v196
    %219 = vmatprep.subr.bf16.mxu0 0
    %220 = vmatpush1.bf16.msra.mxu0 %v195
    %221 = vmatprep.subr.bf16.mxu0 0
    %222 = vmatpush1.bf16.msra.mxu0 %v194
    %223 = vmatprep.subr.bf16.mxu0 0
    %224 = vmatpush1.bf16.msra.mxu0 %v193
    %225 = vmatprep.subr.bf16.mxu0 0
    %226 = vmatpush2.bf16.msra.mxu0 0
    %227 = vmatprep.subr.bf16.mxu0 0
    %228 = vmatpush2.bf16.msra.mxu0 0
    %229 = vmatprep.subr.bf16.mxu0 0
    %230 = vmatpush2.bf16.msra.mxu0 0
    %231 = vmatprep.subr.bf16.mxu0 0
    %232 = vmatpush2.bf16.msra.mxu0 0
    %233 = vmatprep.subr.bf16.mxu0 0
    %234 = vmatpush2.bf16.msra.mxu0 0
    %235 = vmatprep.subr.bf16.mxu0 0
    %236 = vmatpush2.bf16.msra.mxu0 0
    %237 = vmatprep.subr.bf16.mxu0 0
    %238 = vmatpush2.bf16.msra.mxu0 0
    %239 = vmatprep.subr.bf16.mxu0 0
    %240 = vmatpush2.bf16.msra.mxu0 0
    %241 = vmatprep.mubr.bf16.mxu0 0
    %242 = vmatmul.mubr.bf16.gmra.mxu0 %v140
    %v243 = vpop.f32.mrf.mxu0
    %v244 = vadd.f32 %v160, %v243
    %v245 = vpop.f32.mrf.mxu0
    %v246 = vpop.f32.mrf.mxu0
    %v247 = vpop.f32.mrf.mxu0
    %248 = vdwg.mxu0
    %v249 = vmax.f32 %v244, 0.0
    %v250 = vld [vmem:[#allocation5] sm:$0xff]
    %v251 = vpack.c.bf16 %v250, %v250
    %v252 = vpack.c.bf16 %v249, %v249
    %v253 = vld [vmem:[#allocation7 + $0x50] sm:$0xf]
    %v254 = vld [vmem:[#allocation7 + $0x54] sm:$0xf]
    %v255 = vld [vmem:[#allocation7 + $0x58] sm:$0xf]
    %v256 = vld [vmem:[#allocation7 + $0x5c] sm:$0xf]
    %v257 = vld [vmem:[#allocation7 + $0x60] sm:$0xf]
    %v258 = vld [vmem:[#allocation7 + $0x64] sm:$0xf]
    %v259 = vld [vmem:[#allocation7 + $0x68] sm:$0xf]
    %v260 = vld [vmem:[#allocation7 + $0x6c] sm:$0xf]
    %v261 = vld [vmem:[#allocation7 + $0x70] sm:$0xf]
    %v262 = vld [vmem:[#allocation7 + $0x74] sm:$0xf]
    %v263 = vld [vmem:[#allocation7 + $0x78] sm:$0xf]
    %v264 = vld [vmem:[#allocation7 + $0x7c] sm:$0xf]
    %v265 = vld [vmem:[#allocation7 + $0x80] sm:$0xf]
    %v266 = vld [vmem:[#allocation7 + $0x84] sm:$0xf]
    %v267 = vld [vmem:[#allocation7 + $0x88] sm:$0xf]
    %v268 = vld [vmem:[#allocation7 + $0x8c] sm:$0xf]
    %v269 = vld [vmem:[#allocation7 + $0x90] sm:$0xf]
    %v270 = vld [vmem:[#allocation7 + $0x94] sm:$0xf]
    %v273 = vunpack.c.l.b16 %v269
    %v274 = vunpack.c.l.b16 %v270
    %v275 = vpack.c.b16 %v274, %v273
    %vm277 = vcmask 130048
    %v279 = vsel %vm277, %v251, 0
    %281 = vmatprep.subr.bf16.mxu0 0
    %282 = vmatpush1.bf16.msra.mxu0 0
    %283 = vmatprep.subr.bf16.mxu0 0
    %284 = vmatpush1.bf16.msra.mxu0 0
    %285 = vmatprep.subr.bf16.mxu0 0
    %286 = vmatpush1.bf16.msra.mxu0 0
    %287 = vmatprep.subr.bf16.mxu0 0
    %288 = vmatpush1.bf16.msra.mxu0 0
    %289 = vmatprep.subr.bf16.mxu0 0
    %290 = vmatpush1.bf16.msra.mxu0 0
    %291 = vmatprep.subr.bf16.mxu0 0
    %292 = vmatpush1.bf16.msra.mxu0 0
    %293 = vmatprep.subr.bf16.mxu0 0
    %294 = vmatpush1.bf16.msra.mxu0 0
    %295 = vmatprep.subr.bf16.mxu0 0
    %296 = vmatpush1.bf16.msra.mxu0 %v275
    %297 = vmatprep.subr.bf16.mxu0 0
    %298 = vmatpush2.bf16.msra.mxu0 0
    %299 = vmatprep.subr.bf16.mxu0 0
    %300 = vmatpush2.bf16.msra.mxu0 0
    %301 = vmatprep.subr.bf16.mxu0 0
    %302 = vmatpush2.bf16.msra.mxu0 0
    %303 = vmatprep.subr.bf16.mxu0 0
    %304 = vmatpush2.bf16.msra.mxu0 0
    %305 = vmatprep.subr.bf16.mxu0 0
    %306 = vmatpush2.bf16.msra.mxu0 0
    %307 = vmatprep.subr.bf16.mxu0 0
    %308 = vmatpush2.bf16.msra.mxu0 0
    %309 = vmatprep.subr.bf16.mxu0 0
    %310 = vmatpush2.bf16.msra.mxu0 0
    %311 = vmatprep.subr.bf16.mxu0 0
    %312 = vmatpush2.bf16.msra.mxu0 0
    %313 = vmatprep.mubr.bf16.mxu0 0
    %314 = vmatmul.mubr.bf16.gmra.mxu0 %v279
    %v315 = vpop.f32.mrf.mxu0
    %v316 = vadd.f32 0.0, %v315
    %v317 = vpop.f32.mrf.mxu0
    %v318 = vpop.f32.mrf.mxu0
    %v319 = vpop.f32.mrf.mxu0
    %320 = vdwg.mxu0
    %v337 = vunpack.c.l.b16 %v253
    %v338 = vunpack.c.l.b16 %v254
    %v339 = vunpack.c.l.b16 %v255
    %v340 = vunpack.c.l.b16 %v256
    %v341 = vunpack.c.l.b16 %v257
    %v342 = vunpack.c.l.b16 %v258
    %v343 = vunpack.c.l.b16 %v259
    %v344 = vunpack.c.l.b16 %v260
    %v345 = vunpack.c.l.b16 %v261
    %v346 = vunpack.c.l.b16 %v262
    %v347 = vunpack.c.l.b16 %v263
    %v348 = vunpack.c.l.b16 %v264
    %v349 = vunpack.c.l.b16 %v265
    %v350 = vunpack.c.l.b16 %v266
    %v351 = vunpack.c.l.b16 %v267
    %v352 = vunpack.c.l.b16 %v268
    %v353 = vpack.c.b16 %v338, %v337
    %v354 = vpack.c.b16 %v340, %v339
    %v355 = vpack.c.b16 %v342, %v341
    %v356 = vpack.c.b16 %v344, %v343
    %v357 = vpack.c.b16 %v346, %v345
    %v358 = vpack.c.b16 %v348, %v347
    %v359 = vpack.c.b16 %v350, %v349
    %v360 = vpack.c.b16 %v352, %v351
    %369 = vmatprep.subr.bf16.mxu0 0
    %370 = vmatpush1.bf16.msra.mxu0 %v360
    %371 = vmatprep.subr.bf16.mxu0 0
    %372 = vmatpush1.bf16.msra.mxu0 %v359
    %373 = vmatprep.subr.bf16.mxu0 0
    %374 = vmatpush1.bf16.msra.mxu0 %v358
    %375 = vmatprep.subr.bf16.mxu0 0
    %376 = vmatpush1.bf16.msra.mxu0 %v357
    %377 = vmatprep.subr.bf16.mxu0 0
    %378 = vmatpush1.bf16.msra.mxu0 %v356
    %379 = vmatprep.subr.bf16.mxu0 0
    %380 = vmatpush1.bf16.msra.mxu0 %v355
    %381 = vmatprep.subr.bf16.mxu0 0
    %382 = vmatpush1.bf16.msra.mxu0 %v354
    %383 = vmatprep.subr.bf16.mxu0 0
    %384 = vmatpush1.bf16.msra.mxu0 %v353
    %385 = vmatprep.subr.bf16.mxu0 0
    %386 = vmatpush2.bf16.msra.mxu0 0
    %387 = vmatprep.subr.bf16.mxu0 0
    %388 = vmatpush2.bf16.msra.mxu0 0
    %389 = vmatprep.subr.bf16.mxu0 0
    %390 = vmatpush2.bf16.msra.mxu0 0
    %391 = vmatprep.subr.bf16.mxu0 0
    %392 = vmatpush2.bf16.msra.mxu0 0
    %393 = vmatprep.subr.bf16.mxu0 0
    %394 = vmatpush2.bf16.msra.mxu0 0
    %395 = vmatprep.subr.bf16.mxu0 0
    %396 = vmatpush2.bf16.msra.mxu0 0
    %397 = vmatprep.subr.bf16.mxu0 0
    %398 = vmatpush2.bf16.msra.mxu0 0
    %399 = vmatprep.subr.bf16.mxu0 0
    %400 = vmatpush2.bf16.msra.mxu0 0
    %401 = vmatprep.mubr.bf16.mxu0 0
    %402 = vmatmul.mubr.bf16.gmra.mxu0 %v252
    %v403 = vpop.f32.mrf.mxu0
    %v404 = vadd.f32 %v316, %v403
    %v405 = vpop.f32.mrf.mxu0
    %v406 = vpop.f32.mrf.mxu0
    %v407 = vpop.f32.mrf.mxu0
    %408 = vdwg.mxu0
    %v409 = vlaneseq
    %v410 = vshrl.u32 %v409, 7
    %v411 = vsub.s32 0, %v410
    %v412 = vrot.slane %v70, %v411
    %v413 = vadd.f32 %v404, %v412
    %v414 = vmax.f32 %v413, 0.0
    %v415 = vpack.c.bf16 %v414, %v414
    %v416 = vld [vmem:[#allocation7 + $0x98] sm:$0xf]
    %v417 = vld [vmem:[#allocation7 + $0x9c] sm:$0xf]
    %v418 = vld [vmem:[#allocation7 + $0xa0] sm:$0xf]
    %v419 = vld [vmem:[#allocation7 + $0xa4] sm:$0xf]
    %v420 = vld [vmem:[#allocation7 + $0xa8] sm:$0xf]
    %v421 = vld [vmem:[#allocation7 + $0xac] sm:$0xf]
    %v422 = vld [vmem:[#allocation7 + $0xb0] sm:$0xf]
    %v423 = vld [vmem:[#allocation7 + $0xb4] sm:$0xf]
    %v424 = vld [vmem:[#allocation7 + $0xb8] sm:$0xf]
    %v425 = vld [vmem:[#allocation7 + $0xbc] sm:$0xf]
    %v426 = vld [vmem:[#allocation7 + $0xc0] sm:$0xf]
    %v427 = vld [vmem:[#allocation7 + $0xc4] sm:$0xf]
    %v428 = vld [vmem:[#allocation7 + $0xc8] sm:$0xf]
    %v429 = vld [vmem:[#allocation7 + $0xcc] sm:$0xf]
    %v430 = vld [vmem:[#allocation7 + $0xd0] sm:$0xf]
    %v431 = vld [vmem:[#allocation7 + $0xd4] sm:$0xf]
    %v432 = vlaneseq
    %v433 = vshrl.u32 %v432, 7
    %v434 = vsub.s32 0, %v433
    %v435 = vrot.slane %v71, %v434
    %v452 = vunpack.c.l.b16 %v416
    %v453 = vunpack.c.l.b16 %v417
    %v454 = vunpack.c.l.b16 %v418
    %v455 = vunpack.c.l.b16 %v419
    %v456 = vunpack.c.l.b16 %v420
    %v457 = vunpack.c.l.b16 %v421
    %v458 = vunpack.c.l.b16 %v422
    %v459 = vunpack.c.l.b16 %v423
    %v460 = vunpack.c.l.b16 %v424
    %v461 = vunpack.c.l.b16 %v425
    %v462 = vunpack.c.l.b16 %v426
    %v463 = vunpack.c.l.b16 %v427
    %v464 = vunpack.c.l.b16 %v428
    %v465 = vunpack.c.l.b16 %v429
    %v466 = vunpack.c.l.b16 %v430
    %v467 = vunpack.c.l.b16 %v431
    %v468 = vpack.c.b16 %v453, %v452
    %v469 = vpack.c.b16 %v455, %v454
    %v470 = vpack.c.b16 %v457, %v456
    %v471 = vpack.c.b16 %v459, %v458
    %v472 = vpack.c.b16 %v461, %v460
    %v473 = vpack.c.b16 %v463, %v462
    %v474 = vpack.c.b16 %v465, %v464
    %v475 = vpack.c.b16 %v467, %v466
    %484 = vmatprep.subr.bf16.mxu0 0
    %485 = vmatpush1.bf16.msra.mxu0 %v475
    %486 = vmatprep.subr.bf16.mxu0 0
    %487 = vmatpush1.bf16.msra.mxu0 %v474
    %488 = vmatprep.subr.bf16.mxu0 0
    %489 = vmatpush1.bf16.msra.mxu0 %v473
    %490 = vmatprep.subr.bf16.mxu0 0
    %491 = vmatpush1.bf16.msra.mxu0 %v472
    %492 = vmatprep.subr.bf16.mxu0 0
    %493 = vmatpush1.bf16.msra.mxu0 %v471
    %494 = vmatprep.subr.bf16.mxu0 0
    %495 = vmatpush1.bf16.msra.mxu0 %v470
    %496 = vmatprep.subr.bf16.mxu0 0
    %497 = vmatpush1.bf16.msra.mxu0 %v469
    %498 = vmatprep.subr.bf16.mxu0 0
    %499 = vmatpush1.bf16.msra.mxu0 %v468
    %500 = vmatprep.subr.bf16.mxu0 0
    %501 = vmatpush2.bf16.msra.mxu0 0
    %502 = vmatprep.subr.bf16.mxu0 0
    %503 = vmatpush2.bf16.msra.mxu0 0
    %504 = vmatprep.subr.bf16.mxu0 0
    %505 = vmatpush2.bf16.msra.mxu0 0
    %506 = vmatprep.subr.bf16.mxu0 0
    %507 = vmatpush2.bf16.msra.mxu0 0
    %508 = vmatprep.subr.bf16.mxu0 0
    %509 = vmatpush2.bf16.msra.mxu0 0
    %510 = vmatprep.subr.bf16.mxu0 0
    %511 = vmatpush2.bf16.msra.mxu0 0
    %512 = vmatprep.subr.bf16.mxu0 0
    %513 = vmatpush2.bf16.msra.mxu0 0
    %514 = vmatprep.subr.bf16.mxu0 0
    %515 = vmatpush2.bf16.msra.mxu0 0
    %516 = vmatprep.mubr.bf16.mxu0 0
    %517 = vmatmul.mubr.bf16.gmra.mxu0 %v415
    %v518 = vpop.f32.mrf.mxu0
    %v519 = vadd.f32 %v435, %v518
    %v520 = vpop.f32.mrf.mxu0
    %v521 = vpop.f32.mrf.mxu0
    %v522 = vpop.f32.mrf.mxu0
    %523 = vdwg.mxu0
    %v524 = vmax.f32 %v519, 0.0
    %v525 = vpack.c.bf16 %v524, %v524
    %v526 = vld [vmem:[#allocation7 + $0xd8] sm:$0xf]
    %v527 = vld [vmem:[#allocation7 + $0xdc] sm:$0xf]
    %v528 = vld [vmem:[#allocation7 + $0xe0] sm:$0xf]
    %v529 = vld [vmem:[#allocation7 + $0xe4] sm:$0xf]
    %v530 = vld [vmem:[#allocation7 + $0xe8] sm:$0xf]
    %v531 = vld [vmem:[#allocation7 + $0xec] sm:$0xf]
    %v532 = vld [vmem:[#allocation7 + $0xf0] sm:$0xf]
    %v533 = vld [vmem:[#allocation7 + $0xf4] sm:$0xf]
    %v534 = vld [vmem:[#allocation7 + $0xf8] sm:$0xf]
    %v535 = vld [vmem:[#allocation7 + $0xfc] sm:$0xf]
    %v536 = vld [vmem:[#allocation7 + $0x100] sm:$0xf]
    %v537 = vld [vmem:[#allocation7 + $0x104] sm:$0xf]
    %v538 = vld [vmem:[#allocation7 + $0x108] sm:$0xf]
    %v539 = vld [vmem:[#allocation7 + $0x10c] sm:$0xf]
    %v540 = vld [vmem:[#allocation7 + $0x110] sm:$0xf]
    %v541 = vld [vmem:[#allocation7 + $0x114] sm:$0xf]
    %v542 = vlaneseq
    %v543 = vshrl.u32 %v542, 7
    %v544 = vsub.s32 0, %v543
    %v545 = vrot.slane %v72, %v544
    %v562 = vunpack.c.l.b16 %v526
    %v563 = vunpack.c.l.b16 %v527
    %v564 = vunpack.c.l.b16 %v528
    %v565 = vunpack.c.l.b16 %v529
    %v566 = vunpack.c.l.b16 %v530
    %v567 = vunpack.c.l.b16 %v531
    %v568 = vunpack.c.l.b16 %v532
    %v569 = vunpack.c.l.b16 %v533
    %v570 = vunpack.c.l.b16 %v534
    %v571 = vunpack.c.l.b16 %v535
    %v572 = vunpack.c.l.b16 %v536
    %v573 = vunpack.c.l.b16 %v537
    %v574 = vunpack.c.l.b16 %v538
    %v575 = vunpack.c.l.b16 %v539
    %v576 = vunpack.c.l.b16 %v540
    %v577 = vunpack.c.l.b16 %v541
    %v578 = vpack.c.b16 %v563, %v562
    %v579 = vpack.c.b16 %v565, %v564
    %v580 = vpack.c.b16 %v567, %v566
    %v581 = vpack.c.b16 %v569, %v568
    %v582 = vpack.c.b16 %v571, %v570
    %v583 = vpack.c.b16 %v573, %v572
    %v584 = vpack.c.b16 %v575, %v574
    %v585 = vpack.c.b16 %v577, %v576
    %594 = vmatprep.subr.bf16.mxu0 0
    %595 = vmatpush1.bf16.msra.mxu0 %v585
    %596 = vmatprep.subr.bf16.mxu0 0
    %597 = vmatpush1.bf16.msra.mxu0 %v584
    %598 = vmatprep.subr.bf16.mxu0 0
    %599 = vmatpush1.bf16.msra.mxu0 %v583
    %600 = vmatprep.subr.bf16.mxu0 0
    %601 = vmatpush1.bf16.msra.mxu0 %v582
    %602 = vmatprep.subr.bf16.mxu0 0
    %603 = vmatpush1.bf16.msra.mxu0 %v581
    %604 = vmatprep.subr.bf16.mxu0 0
    %605 = vmatpush1.bf16.msra.mxu0 %v580
    %606 = vmatprep.subr.bf16.mxu0 0
    %607 = vmatpush1.bf16.msra.mxu0 %v579
    %608 = vmatprep.subr.bf16.mxu0 0
    %609 = vmatpush1.bf16.msra.mxu0 %v578
    %610 = vmatprep.subr.bf16.mxu0 0
    %611 = vmatpush2.bf16.msra.mxu0 0
    %612 = vmatprep.subr.bf16.mxu0 0
    %613 = vmatpush2.bf16.msra.mxu0 0
    %614 = vmatprep.subr.bf16.mxu0 0
    %615 = vmatpush2.bf16.msra.mxu0 0
    %616 = vmatprep.subr.bf16.mxu0 0
    %617 = vmatpush2.bf16.msra.mxu0 0
    %618 = vmatprep.subr.bf16.mxu0 0
    %619 = vmatpush2.bf16.msra.mxu0 0
    %620 = vmatprep.subr.bf16.mxu0 0
    %621 = vmatpush2.bf16.msra.mxu0 0
    %622 = vmatprep.subr.bf16.mxu0 0
    %623 = vmatpush2.bf16.msra.mxu0 0
    %624 = vmatprep.subr.bf16.mxu0 0
    %625 = vmatpush2.bf16.msra.mxu0 0
    %626 = vmatprep.mubr.bf16.mxu0 0
    %627 = vmatmul.mubr.bf16.gmra.mxu0 %v525
    %v628 = vpop.f32.mrf.mxu0
    %v629 = vadd.f32 %v545, %v628
    %v630 = vpop.f32.mrf.mxu0
    %v631 = vpop.f32.mrf.mxu0
    %v632 = vpop.f32.mrf.mxu0
    %633 = vdwg.mxu0
    %634 = vst [vmem:[#allocation10] sm:$0xff] %v629
    // Predicated region
    $region34: #{tpu_custom_call.1} parent=1 // pred_check
      _
    $region35: #{tpu_custom_call.1} parent=1 // pred_check_branch
      %636 = sbr.rel (0) target = $region37
    $region36: #{tpu_custom_call.1} parent=1 // pred_region
      %s638 = ssub.s32 128, 128
      %639 = vsyncadd [#allocation4], %s638
      %s641 = sshll.u32 [#allocation10], 4
      %s642 = int_to_ptr.vmem [resolvable:$true] %s641
      %644 = dma.vmem_to_hbm [thread:$0]  %s642, 128, %s4, [#allocation4]
    $region37: #{tpu_custom_call.1} parent=1 // pred_fallthru
      _
    // Predicated region
    $region38: #{tpu_custom_call.1} parent=1 // pred_check
      _
    $region39: #{tpu_custom_call.1} parent=1 // pred_check_branch
      %646 = sbr.rel (0) target = $region41
    $region40: #{tpu_custom_call.1} parent=1 // pred_region
      %647 = dma.done [#allocation4], 128
    $region41: #{tpu_custom_call.1} parent=1 // pred_fallthru
      _
    %648 = vsyncpa [#allocation3], 1
    %649 = vsyncpa [#allocation6], 1
    %650 = vsyncpa [#allocation9], 1
    %651 = vsyncpa [#allocation4], 1

</llo_original>
